<compile_context>
chip_gen: v5e
topology: v5e:2x2
jax: 0.10.0
libtpu: 0.0.40
codegen_flags: <defaults>
</compile_context>

<pallas_src>
import numpy as np

import jax
import jax.numpy as jnp
from jax.experimental import pallas as pl
from jax.experimental.pallas import tpu as pltpu


# ----------------------------------------------------------------------------
# Generation-aware budgets
# ----------------------------------------------------------------------------
def _tpu_budgets():
    """(vmem_limit_bytes, max_spatial_tile) — big tiles on 128 MiB parts (v5e/v6e),
    conservative on v7x (64 MiB physical)."""
    cap = None
    try:
        info = pltpu.get_tpu_info()
        cap = getattr(info, "vmem_capacity_bytes", None)
    except Exception:
        cap = None
    if cap is None:
        cap = 64 * 1024 * 1024  # assume the smallest (v7x-sized) part
    if cap >= 128 * 1024 * 1024:
        return 96 * 1024 * 1024, 4096   # v5e / v6e
    return 40 * 1024 * 1024, 2048       # v7x


_VMEM_LIMIT_BYTES, _MAX_SPATIAL_TILE = _tpu_budgets()


def _spatial_tile_and_pad(m, max_tile=_MAX_SPATIAL_TILE):
    """Lane-dense tile for the flattened spatial axis.

    Returns (tile, padded_m).  Full extent if small; otherwise the largest 128-multiple
    divisor <= max_tile; if none exists, pad M up to a tile multiple (keeps stores
    unmasked and blocks bounded instead of one giant block)."""
    if m <= max_tile:
        return m, m
    for t in range(max_tile, 127, -128):
        if m % t == 0:
            return t, m
    m_pad = ((m + max_tile - 1) // max_tile) * max_tile
    return max_tile, m_pad


# ----------------------------------------------------------------------------
# Pallas kernels
# ----------------------------------------------------------------------------
def _fused_feature_kernel(xpre_ref, xpost_ref, wT_ref, b_ref, o_ref):
    # xpre/xpost: (1, Cin, TM) f32   wT: (F, Cin) f32   b: (F, 1) f32
    # o: (1, 2, F, TM) bf16  — pre/post streams stacked, shared weights stay resident.
    w = wT_ref[...]
    b = b_ref[...]
    ypre = jnp.dot(w, xpre_ref[0], preferred_element_type=jnp.float32) + b
    ypost = jnp.dot(w, xpost_ref[0], preferred_element_type=jnp.float32) + b
    o_ref[0, 0] = jnp.maximum(ypre, 0.0).astype(o_ref.dtype)
    o_ref[0, 1] = jnp.maximum(ypost, 0.0).astype(o_ref.dtype)


def _heads_kernel(f_ref, wT_ref, b_ref, o_ref):
    # f: (1, 2, F, TM) bf16   wT: (Ct, 2F) bf16   b: (Ct, 1) f32   o: (1, Ct, TM) f32
    # Single K=2F MXU matmul == 1x1 conv on concat([f_pre, f_post], channel) with the
    # loc+cls weights stacked along Cout — the concat is never materialized in HBM.
    f2 = jnp.concatenate([f_ref[0, 0], f_ref[0, 1]], axis=0)   # (2F, TM), VMEM-local
    y = jnp.dot(wT_ref[...], f2, preferred_element_type=jnp.float32)
    o_ref[0] = y + b_ref[...]


def _bilinear_kernel(x_ref, ah_ref, awt_ref, o_ref):
    # x: (CB, h, w)   ah: (out_h, h)   awt: (w, TW)   o: (CB, out_h, TW)
    cb, h, w = x_ref.shape
    tw = awt_ref.shape[1]
    # Width pass: ONE flat MXU matmul over the merged (CB*h) rows — no broadcast of awt.
    tmp = jnp.dot(x_ref[...].reshape(cb * h, w), awt_ref[...],
                  preferred_element_type=jnp.float32).reshape(cb, h, tw)
    ah = ah_ref[...]
    # Height pass: per-slice 2-D dots (static CB), no CB-replication of ah.
    for i in range(cb):
        o_ref[i] = jnp.dot(ah, tmp[i], preferred_element_type=jnp.float32)


# ----------------------------------------------------------------------------
# Wrappers
# ----------------------------------------------------------------------------
def fused_feature_conv(x_pre_flat, x_post_flat, wT, b, tm):
    """Shared-weight 1x1 conv + ReLU on both streams: (N,Cin,M)x2 -> (N,2,F,M) bf16."""
    N, Cin, M = x_pre_flat.shape
    F = wT.shape[0]
    flops = 2 * 2 * N * M * Cin * F
    bytes_accessed = 4 * 2 * N * Cin * M + 2 * 2 * N * F * M + 4 * (F * Cin + F)
    return pl.pallas_call(
        _fused_feature_kernel,
        out_shape=jax.ShapeDtypeStruct((N, 2, F, M), jnp.bfloat16),
        grid=(N, M // tm),
        in_specs=[
            pl.BlockSpec((1, Cin, tm), lambda n, m: (n, 0, m)),
            pl.BlockSpec((1, Cin, tm), lambda n, m: (n, 0, m)),
            pl.BlockSpec((F, Cin), lambda n, m: (0, 0)),
            pl.BlockSpec((F, 1), lambda n, m: (0, 0)),
        ],
        out_specs=pl.BlockSpec((1, 2, F, tm), lambda n, m: (n, 0, 0, m)),
        compiler_params=pltpu.CompilerParams(
            dimension_semantics=("parallel", "parallel"),
            vmem_limit_bytes=_VMEM_LIMIT_BYTES,
        ),
        cost_estimate=pl.CostEstimate(
            flops=int(flops), transcendentals=0, bytes_accessed=int(bytes_accessed)),
    )(x_pre_flat, x_post_flat, wT, b.reshape(F, 1))


def fused_heads_conv(f_stacked, wT, b, tm):
    """loc+cls heads in one pass: (N,2,F,M) bf16 -> (N,Ct,M) f32 (single K=2F matmul)."""
    N, _, F, M = f_stacked.shape
    Ct = wT.shape[0]
    flops = 2 * N * M * (2 * F) * Ct
    bytes_accessed = 2 * 2 * N * F * M + 4 * N * Ct * M + 2 * Ct * 2 * F + 4 * Ct
    return pl.pallas_call(
        _heads_kernel,
        out_shape=jax.ShapeDtypeStruct((N, Ct, M), jnp.float32),
        grid=(N, M // tm),
        in_specs=[
            pl.BlockSpec((1, 2, F, tm), lambda n, m: (n, 0, 0, m)),
            pl.BlockSpec((Ct, 2 * F), lambda n, m: (0, 0)),
            pl.BlockSpec((Ct, 1), lambda n, m: (0, 0)),
        ],
        out_specs=pl.BlockSpec((1, Ct, tm), lambda n, m: (n, 0, m)),
        compiler_params=pltpu.CompilerParams(
            dimension_semantics=("parallel", "parallel"),
            vmem_limit_bytes=_VMEM_LIMIT_BYTES,
        ),
        cost_estimate=pl.CostEstimate(
            flops=int(flops), transcendentals=0, bytes_accessed=int(bytes_accessed)),
    )(f_stacked, wT, b.reshape(Ct, 1))


def _bilinear_matrix(out_size, in_size):
    """Row-interpolation matrix matching F.interpolate(mode='bilinear',
    align_corners=False) — half-pixel centers, clamped."""
    scale = in_size / out_size
    dst = np.arange(out_size, dtype=np.float64)
    src = (dst + 0.5) * scale - 0.5
    src = np.clip(src, 0.0, in_size - 1)
    lo = np.floor(src).astype(np.int64)
    hi = np.minimum(lo + 1, in_size - 1)
    frac = (src - lo).astype(np.float32)
    A = np.zeros((out_size, in_size), dtype=np.float32)
    np.add.at(A, (np.arange(out_size), lo), 1.0 - frac)
    np.add.at(A, (np.arange(out_size), hi), frac)
    return A


def bilinear_resize(x_nchw, out_h, out_w):
    """F.interpolate(x, size=(out_h,out_w), mode='bilinear') as separable Pallas matmuls.

    The output is tiled over out_w (lane-dense, 128-multiple) and CB (N*C) slices per
    grid step are chosen from a byte budget so double-buffered blocks stay inside the
    v7x VMEM budget; the second grid axis also feeds both v7x TensorCores.
    # TODO(synk): at very large resolutions switch the dense interpolation-matrix matmuls
    # to a banded 2-tap gather + VPU lerp with data-dependent row prefetch.
    """
    N, C, h, w = x_nchw.shape
    A_h = jnp.asarray(_bilinear_matrix(out_h, h))            # (out_h, h)
    A_wT = jnp.asarray(_bilinear_matrix(out_w, w)).T          # (w, out_w)
    NC = N * C

    # Lane tile over out_w (full extent if small; else the largest 128-multiple divisor).
    if out_w <= 2048:
        TW = out_w
    else:
        TW = next((t for t in range(2048, 127, -128) if out_w % t == 0), out_w)

    # CB from a per-block byte budget so in/out blocks (double-buffered) fit everywhere.
    budget = 8 * 1024 * 1024
    per_slice_bytes = 4 * max(out_h * TW, h * w)
    cb_cap = max(1, budget // per_slice_bytes)
    CB = 1
    for cand in (16, 8, 4, 2, 1):
        if cand <= cb_cap and NC % cand == 0:
            CB = cand
            break

    x3 = x_nchw.reshape(NC, h, w)
    flops = 2 * NC * (h * w * out_w + out_h * h * out_w)
    bytes_accessed = 4 * (NC * h * w + NC * out_h * out_w + out_h * h + w * out_w)
    out = pl.pallas_call(
        _bilinear_kernel,
        out_shape=jax.ShapeDtypeStruct((NC, out_h, out_w), jnp.float32),
        grid=(NC // CB, out_w // TW),
        in_specs=[
            pl.BlockSpec((CB, h, w), lambda i, j: (i, 0, 0)),
            pl.BlockSpec((out_h, h), lambda i, j: (0, 0)),
            pl.BlockSpec((w, TW), lambda i, j: (0, j)),
        ],
        out_specs=pl.BlockSpec((CB, out_h, TW), lambda i, j: (i, 0, j)),
        compiler_params=pltpu.CompilerParams(
            dimension_semantics=("parallel", "parallel"),
            vmem_limit_bytes=_VMEM_LIMIT_BYTES,
        ),
        cost_estimate=pl.CostEstimate(
            flops=int(flops), transcendentals=0, bytes_accessed=int(bytes_accessed)),
    )(x3, A_h, A_wT)
    return out.reshape(N, C, out_h, out_w)


# ----------------------------------------------------------------------------
# Synthetic inner model (stands in for the wrapped `model`)
# ----------------------------------------------------------------------------
def init_params(key, in_ch, feat_ch, loc_ch, cls_ch):
    k1, k2, k3 = jax.random.split(key, 3)
    w_feat = jax.random.normal(k1, (in_ch, feat_ch), jnp.float32) * 0.1
    w_loc = jax.random.normal(k2, (2 * feat_ch, loc_ch), jnp.float32) * 0.1
    w_cls = jax.random.normal(k3, (2 * feat_ch, cls_ch), jnp.float32) * 0.1
    # Kernel layouts: feature weights (F, Cin); loc/cls fused along Cout into a single
    # (Ct, 2F) matrix whose K axis matches the in-kernel [pre, post] feature stacking.
    w_headsT = jnp.concatenate([w_loc.T, w_cls.T], axis=0)    # (loc+cls, 2F)
    return {
        "w_featT": w_feat.T,                                   # (F, Cin)  f32
        "b_feat": jnp.zeros((feat_ch,), jnp.float32),
        "w_headsT": w_headsT.astype(jnp.bfloat16),             # (Ct, 2F)  bf16
        "b_heads": jnp.zeros((loc_ch + cls_ch,), jnp.float32),
        "loc_ch": loc_ch,
        "cls_ch": cls_ch,
    }


def _inner_model_heads(params, x_pre, x_post):
    """Returns the fused (N, loc_ch+cls_ch, Hd, Wd) head maps (loc first, cls second)."""
    N, C, H, W = x_pre.shape
    # TODO(synk): fold this stride-2 subsample into the feature kernel's DMA (strided
    # index_map / in-kernel VPU decimation) to drop one HBM write+read per stream.
    xp = x_pre[:, :, ::2, ::2]
    xq = x_post[:, :, ::2, ::2]
    Hd, Wd = xp.shape[2], xp.shape[3]
    M = Hd * Wd
    tm, m_pad = _spatial_tile_and_pad(M)

    xp_flat = xp.reshape(N, C, M)
    xq_flat = xq.reshape(N, C, M)
    if m_pad != M:
        pad = ((0, 0), (0, 0), (0, m_pad - M))
        xp_flat = jnp.pad(xp_flat, pad)
        xq_flat = jnp.pad(xq_flat, pad)

    f = fused_feature_conv(xp_flat, xq_flat, params["w_featT"], params["b_feat"], tm)
    heads = fused_heads_conv(f, params["w_headsT"], params["b_heads"], tm)
    if m_pad != M:
        heads = heads[:, :, :M]
    Ct = params["loc_ch"] + params["cls_ch"]
    return heads.reshape(N, Ct, Hd, Wd)


# ----------------------------------------------------------------------------
# ModelWraper.forward equivalent
# ----------------------------------------------------------------------------
def model_wraper_forward(params, inputs_pre, inputs_post, is_split_loss=True):
    # Variable(...) and .cuda() are no-ops in JAX.
    heads = _inner_model_heads(params, inputs_pre, inputs_post)
    loc_ch = params["loc_ch"]
    H, W = inputs_pre.shape[2], inputs_pre.shape[3]
    Hp, Wp = inputs_post.shape[2], inputs_post.shape[3]

    if is_split_loss and (Hp, Wp) == (H, W):
        # Same target size: upsample the fused heads tensor once (doubles NC so the CB
        # sublane block fills better), then split with views.
        up = bilinear_resize(heads, H, W)
        loc = up[:, :loc_ch]
        cls = up[:, loc_ch:]
    else:
        loc = bilinear_resize(heads[:, :loc_ch], H, W)
        cls = bilinear_resize(heads[:, loc_ch:], Hp, Wp) if is_split_loss else None
    return loc, cls


if __name__ == "__main__":
    key = jax.random.PRNGKey(0)
    k_pre, k_post, k_params = jax.random.split(key, 3)

    N, C, H, W = 2, 4, 16, 16
    x_pre = jax.random.normal(k_pre, (N, C, H, W), jnp.float32)
    x_post = jax.random.normal(k_post, (N, C, H, W), jnp.float32)

    params = init_params(k_params, in_ch=C, feat_ch=8, loc_ch=2, cls_ch=2)

    loc, cls = model_wraper_forward(params, x_pre, x_post, is_split_loss=True)
    jax.block_until_ready((loc, cls))

    assert loc.shape == (N, 2, H, W), loc.shape
    assert cls.shape == (N, 2, H, W), cls.shape
    assert loc.dtype == jnp.float32 and cls.dtype == jnp.float32
    print("KERNEL_OK")
</pallas_src>

<mosaic_0001>
module attributes {stable_mosaic.version = 11 : i64} {
  func.func @_fused_feature_kernel(%arg0: i32, %arg1: i32, %arg2: memref<1x4x64xf32, #tpu.memory_space<vmem>>, %arg3: memref<1x4x64xf32, #tpu.memory_space<vmem>>, %arg4: memref<8x4xf32, #tpu.memory_space<vmem>>, %arg5: memref<8x1xf32, #tpu.memory_space<vmem>>, %arg6: memref<1x2x8x64xbf16, #tpu.memory_space<vmem>>) attributes {dimension_semantics = [#tpu.dimension_semantics<parallel>, #tpu.dimension_semantics<parallel>], iteration_bounds = array<i64: 2, 1>, scalar_prefetch = 0 : i64, scratch_operands = 0 : i64, tpu.core_type = #tpu.core_type<tc>, window_params = [{transform_indices = @transform_0, window_bounds = array<i64: 1, 4, 64>}, {transform_indices = @transform_1, window_bounds = array<i64: 1, 4, 64>}, {pipeline_mode = #tpu.pipeline_mode<synchronous>, transform_indices = @transform_2, window_bounds = array<i64: 8, 4>}, {pipeline_mode = #tpu.pipeline_mode<synchronous>, transform_indices = @transform_3, window_bounds = array<i64: 8, 1>}, {transform_indices = @transform_4, window_bounds = array<i64: 1, 2, 8, 64>}]} {
    %c0 = arith.constant 0 : index
    %c0_0 = arith.constant 0 : index
    %0 = vector.load %arg4[%c0, %c0_0] : memref<8x4xf32, #tpu.memory_space<vmem>>, vector<8x4xf32>
    %c0_1 = arith.constant 0 : index
    %c0_2 = arith.constant 0 : index
    %1 = vector.load %arg5[%c0_1, %c0_2] : memref<8x1xf32, #tpu.memory_space<vmem>>, vector<8x1xf32>
    %c0_3 = arith.constant 0 : index
    %c0_4 = arith.constant 0 : index
    %c0_5 = arith.constant 0 : index
    %2 = vector.load %arg2[%c0_3, %c0_4, %c0_5] : memref<1x4x64xf32, #tpu.memory_space<vmem>>, vector<1x4x64xf32>
    %3 = vector.shape_cast %2 : vector<1x4x64xf32> to vector<4x64xf32>
    %cst = arith.constant dense<0.000000e+00> : vector<8x64xf32>
    %4 = tpu.matmul %0, %3, %cst {dimension_numbers = #tpu.dot_dimension_numbers<[1], [0], [0], [1], [0, 0, 1, 1], [], []>} : vector<8x4xf32>, vector<4x64xf32>, vector<8x64xf32> -> vector<8x64xf32>
    %5 = vector.broadcast %1 : vector<8x1xf32> to vector<8x64xf32>
    %6 = arith.addf %4, %5 : vector<8x64xf32>
    %c0_6 = arith.constant 0 : index
    %c0_7 = arith.constant 0 : index
    %c0_8 = arith.constant 0 : index
    %7 = vector.load %arg3[%c0_6, %c0_7, %c0_8] : memref<1x4x64xf32, #tpu.memory_space<vmem>>, vector<1x4x64xf32>
    %8 = vector.shape_cast %7 : vector<1x4x64xf32> to vector<4x64xf32>
    %cst_9 = arith.constant dense<0.000000e+00> : vector<8x64xf32>
    %9 = tpu.matmul %0, %8, %cst_9 {dimension_numbers = #tpu.dot_dimension_numbers<[1], [0], [0], [1], [0, 0, 1, 1], [], []>} : vector<8x4xf32>, vector<4x64xf32>, vector<8x64xf32> -> vector<8x64xf32>
    %10 = vector.broadcast %1 : vector<8x1xf32> to vector<8x64xf32>
    %11 = arith.addf %9, %10 : vector<8x64xf32>
    %cst_10 = arith.constant 0.000000e+00 : f32
    %12 = vector.broadcast %cst_10 : f32 to vector<8x64xf32>
    %13 = arith.maximumf %6, %12 : vector<8x64xf32>
    %14 = arith.truncf %13 : vector<8x64xf32> to vector<8x64xbf16>
    %c0_11 = arith.constant 0 : index
    %c0_12 = arith.constant 0 : index
    %c0_13 = arith.constant 0 : index
    %c0_14 = arith.constant 0 : index
    %15 = vector.load %arg6[%c0_11, %c0_12, %c0_13, %c0_14] : memref<1x2x8x64xbf16, #tpu.memory_space<vmem>>, vector<1x1x8x64xbf16>
    %16 = vector.shape_cast %15 : vector<1x1x8x64xbf16> to vector<8x64xbf16>
    %17 = vector.shape_cast %14 : vector<8x64xbf16> to vector<1x1x8x64xbf16>
    tpu.vector_store %arg6[%c0_11, %c0_12, %c0_13, %c0_14], %17 {strides = array<i32>} : memref<1x2x8x64xbf16, #tpu.memory_space<vmem>>, vector<1x1x8x64xbf16>,
    %cst_15 = arith.constant 0.000000e+00 : f32
    %18 = vector.broadcast %cst_15 : f32 to vector<8x64xf32>
    %19 = arith.maximumf %11, %18 : vector<8x64xf32>
    %20 = arith.truncf %19 : vector<8x64xf32> to vector<8x64xbf16>
    %c0_16 = arith.constant 0 : index
    %c1 = arith.constant 1 : index
    %c0_17 = arith.constant 0 : index
    %c0_18 = arith.constant 0 : index
    %21 = vector.load %arg6[%c0_16, %c1, %c0_17, %c0_18] : memref<1x2x8x64xbf16, #tpu.memory_space<vmem>>, vector<1x1x8x64xbf16>
    %22 = vector.shape_cast %21 : vector<1x1x8x64xbf16> to vector<8x64xbf16>
    %23 = vector.shape_cast %20 : vector<8x64xbf16> to vector<1x1x8x64xbf16>
    tpu.vector_store %arg6[%c0_16, %c1, %c0_17, %c0_18], %23 {strides = array<i32>} : memref<1x2x8x64xbf16, #tpu.memory_space<vmem>>, vector<1x1x8x64xbf16>,
    return
  }
  func.func @transform_0(%arg0: i32, %arg1: i32) -> (i32, i32, i32) {
    %c0_i32 = arith.constant 0 : i32
    %c0_i32_0 = arith.constant 0 : i32
    return %arg0, %c0_i32, %arg1 : i32, i32, i32
  }
  func.func @transform_1(%arg0: i32, %arg1: i32) -> (i32, i32, i32) {
    %c0_i32 = arith.constant 0 : i32
    %c0_i32_0 = arith.constant 0 : i32
    return %arg0, %c0_i32, %arg1 : i32, i32, i32
  }
  func.func @transform_2(%arg0: i32, %arg1: i32) -> (i32, i32) {
    %c0_i32 = arith.constant 0 : i32
    %c0_i32_0 = arith.constant 0 : i32
    %c0_i32_1 = arith.constant 0 : i32
    return %c0_i32, %c0_i32_0 : i32, i32
  }
  func.func @transform_3(%arg0: i32, %arg1: i32) -> (i32, i32) {
    %c0_i32 = arith.constant 0 : i32
    %c0_i32_0 = arith.constant 0 : i32
    %c0_i32_1 = arith.constant 0 : i32
    return %c0_i32, %c0_i32_0 : i32, i32
  }
  func.func @transform_4(%arg0: i32, %arg1: i32) -> (i32, i32, i32, i32) {
    %c0_i32 = arith.constant 0 : i32
    %c0_i32_0 = arith.constant 0 : i32
    %c0_i32_1 = arith.constant 0 : i32
    return %arg0, %c0_i32, %c0_i32_0, %arg1 : i32, i32, i32, i32
  }
}

</mosaic_0001>

<llo_original>
// kernel: tpu_custom_call.1
$region0: #{tpu_custom_call.1}
  #allocation0 [shape = 'u32[]', space=smem, size = 0x4, offset = 0x4, fixed_abs, tag = 'smem constant byte address 0x4 - core index']
  #allocation1 [shape = 'u32[72,128]{1,0:T(1,128)}', space=vmem, size = 0x9000, scoped, tag = 'internal scratch']
  %s0 = inlined_call_operand.vmem [shape: f32[2,4,64], index: 0, kind: input, shape index: {}]
  %s1 = inlined_call_operand.vmem [shape: f32[2,4,64], index: 1, kind: input, shape index: {}]
  %s2 = inlined_call_operand.vmem [shape: f32[8,4], index: 2, kind: input, shape index: {}]
  %s3 = inlined_call_operand.vmem [shape: f32[8,1], index: 3, kind: input, shape index: {}]
  %s4 = inlined_call_operand.hbm [shape: bf16[2,2,8,64], index: 4, kind: output, shape index: {}]
  %s5 = sld [smem:[#allocation0]]
  $region49: #{tpu_custom_call.1} parent=0
    _
  %s7 = ssub.s32 1, %s5
  %s8 = scalar_select 0, %s7, %s5
  $region1: #{tpu_custom_call.1} parent=0
    #allocation2 [shape = 'u8[8192]{0}', space=vmem, size = 0x2000, scoped, tag = 'output window, operand 0']
    #allocation3 [shape = 's32[2]{0}', space=sflag, size = 0x8, scoped, tag = 'scoped memory for tpu_custom_call.1']
    %9 = vsyncpa [#allocation3], 0
    %s10 = scalar_lea.sflag [#allocation3], 1
    %11 = vsyncpa %s10, 0
    loop: start=0, step=1, limit=4
    $region2: #{tpu_custom_call.1} parent=1 // loop_pre_header
      _
    $region3: #{tpu_custom_call.1} parent=1 // loop_header
      %s13 = sphi 0, %s17
      %p14 = scmp.ge.s32.totalorder %s13, 4
      %s20 = sphi 0, %s32
      %s21 = sphi 0, %s28
      %s22 = sphi 0, %s20
      %s23 = sphi 0, %s21
      %s24 = sphi 0, %s22
      %s25 = sphi 0, %s23
      %s37 = sphi 0, %s39
      %s40 = sphi 0, %s37
      %s41 = sphi 0, %s40
      %s57 = sphi 0, %s41
      %s65 = sphi 0, %s67
      %s68 = sphi 0, %s65
      %s69 = sphi 0, %s68
      %s85 = sphi 0, %s69
      %s89 = sphi 0, %s89
      %s91 = sphi 0, %s89
      %s92 = sphi 0, %s91
      %s106 = sphi 0, %s92
      %s110 = sphi 0, %s110
      %s112 = sphi 0, %s110
      %s113 = sphi 0, %s112
      %s127 = sphi 0, %s113
      %s135 = sphi 0, %s137
      %s138 = sphi 0, %s135
      %s139 = sphi 0, %s138
      %s155 = sphi 0, %s139
    $region4: #{tpu_custom_call.1} parent=1 // loop_header_branch
      %16 = sbr.rel (%p14) target = $region8
    $region5: #{tpu_custom_call.1} parent=1 // loop_body
      %s18 = ssub.s32 %s13, 1
      %s19 = ssub.s32 %s13, 2
      %s26 = sadd.s32 1, %s21
      %p27 = scmp.ge.s32.totalorder %s26, 1
      %s28 = scalar_select %p27, 0, %s26
      %s29 = sadd.s32 1, %s20
      %s30 = scalar_select %p27, %s29, %s20
      %p31 = scmp.ge.s32.totalorder %s30, 2
      %s32 = scalar_select %p31, 0, %s30
      %s33 = ssub.s32 %s20, %s32
      %s34 = ssub.s32 %s21, %s28
      %s35 = sor.u32 %s33, %s34
      %p36 = scmp.eq.s32.totalorder %s35, 0
      %s38 = sadd.s32 %s37, 1
      %s39 = scalar_select %p36, %s37, %s38
      %p42 = pneg %p36
      %p43 = scmp.eq.s32.totalorder %s13, 1
      %p44 = por %p42, %p43
      %p45 = scmp.ne.s32.totalorder %s37, %s40
      %p46 = scmp.eq.s32.totalorder %s13, 0
      %p47 = por %p45, %p46
      %p48 = scmp.ne.s32.totalorder %s37, %s40
      %p49 = scmp.eq.s32.totalorder %s18, 1
      %p50 = por %p48, %p49
      %p51 = scmp.ne.s32.totalorder %s40, %s41
      %p52 = scmp.eq.s32.totalorder %s18, 0
      %p53 = por %p51, %p52
      %p54 = scmp.ne.s32.totalorder %s40, %s41
      %p55 = scmp.eq.s32.totalorder %s19, 1
      %p56 = por %p54, %p55
      %p58 = scmp.ne.s32.totalorder %s41, %s57
      %p59 = scmp.eq.s32.totalorder %s19, 0
      %p60 = por %p58, %p59
      %s61 = ssub.s32 %s20, %s32
      %s62 = ssub.s32 %s21, %s28
      %s63 = sor.u32 %s61, %s62
      %p64 = scmp.eq.s32.totalorder %s63, 0
      %s66 = sadd.s32 %s65, 1
      %s67 = scalar_select %p64, %s65, %s66
      %p70 = pneg %p64
      %p71 = scmp.eq.s32.totalorder %s13, 1
      %p72 = por %p70, %p71
      %p73 = scmp.ne.s32.totalorder %s65, %s68
      %p74 = scmp.eq.s32.totalorder %s13, 0
      %p75 = por %p73, %p74
      %p76 = scmp.ne.s32.totalorder %s65, %s68
      %p77 = scmp.eq.s32.totalorder %s18, 1
      %p78 = por %p76, %p77
      %p79 = scmp.ne.s32.totalorder %s68, %s69
      %p80 = scmp.eq.s32.totalorder %s18, 0
      %p81 = por %p79, %p80
      %p82 = scmp.ne.s32.totalorder %s68, %s69
      %p83 = scmp.eq.s32.totalorder %s19, 1
      %p84 = por %p82, %p83
      %p86 = scmp.ne.s32.totalorder %s69, %s85
      %p87 = scmp.eq.s32.totalorder %s19, 0
      %p88 = por %p86, %p87
      %s90 = sadd.s32 %s89, 1
      %p93 = scmp.eq.s32.totalorder %s13, 1
      %p94 = scmp.ne.s32.totalorder %s89, %s91
      %p95 = scmp.eq.s32.totalorder %s13, 0
      %p96 = por %p94, %p95
      %p97 = scmp.ne.s32.totalorder %s89, %s91
      %p98 = scmp.eq.s32.totalorder %s18, 1
      %p99 = por %p97, %p98
      %p100 = scmp.ne.s32.totalorder %s91, %s92
      %p101 = scmp.eq.s32.totalorder %s18, 0
      %p102 = por %p100, %p101
      %p103 = scmp.ne.s32.totalorder %s91, %s92
      %p104 = scmp.eq.s32.totalorder %s19, 1
      %p105 = por %p103, %p104
      %p107 = scmp.ne.s32.totalorder %s92, %s106
      %p108 = scmp.eq.s32.totalorder %s19, 0
      %p109 = por %p107, %p108
      %s111 = sadd.s32 %s110, 1
      %p114 = scmp.eq.s32.totalorder %s13, 1
      %p115 = scmp.ne.s32.totalorder %s110, %s112
      %p116 = scmp.eq.s32.totalorder %s13, 0
      %p117 = por %p115, %p116
      %p118 = scmp.ne.s32.totalorder %s110, %s112
      %p119 = scmp.eq.s32.totalorder %s18, 1
      %p120 = por %p118, %p119
      %p121 = scmp.ne.s32.totalorder %s112, %s113
      %p122 = scmp.eq.s32.totalorder %s18, 0
      %p123 = por %p121, %p122
      %p124 = scmp.ne.s32.totalorder %s112, %s113
      %p125 = scmp.eq.s32.totalorder %s19, 1
      %p126 = por %p124, %p125
      %p128 = scmp.ne.s32.totalorder %s113, %s127
      %p129 = scmp.eq.s32.totalorder %s19, 0
      %p130 = por %p128, %p129
      %s131 = ssub.s32 %s20, %s32
      %s132 = ssub.s32 %s21, %s28
      %s133 = sor.u32 %s131, %s132
      %p134 = scmp.eq.s32.totalorder %s133, 0
      %s136 = sadd.s32 %s135, 1
      %s137 = scalar_select %p134, %s135, %s136
      %p140 = pneg %p134
      %p141 = scmp.eq.s32.totalorder %s13, 1
      %p142 = por %p140, %p141
      %p143 = scmp.ne.s32.totalorder %s135, %s138
      %p144 = scmp.eq.s32.totalorder %s13, 0
      %p145 = por %p143, %p144
      %p146 = scmp.ne.s32.totalorder %s135, %s138
      %p147 = scmp.eq.s32.totalorder %s18, 1
      %p148 = por %p146, %p147
      %p149 = scmp.ne.s32.totalorder %s138, %s139
      %p150 = scmp.eq.s32.totalorder %s18, 0
      %p151 = por %p149, %p150
      %p152 = scmp.ne.s32.totalorder %s138, %s139
      %p153 = scmp.eq.s32.totalorder %s19, 1
      %p154 = por %p152, %p153
      %p156 = scmp.ne.s32.totalorder %s139, %s155
      %p157 = scmp.eq.s32.totalorder %s19, 0
      %p158 = por %p156, %p157
      %p159 = scmp.le.s32.totalorder 1, %s13
      %p160 = scmp.lt.s32.totalorder %s13, 3
      %p161 = pnand %p159, %p160
      %p162 = pneg %p161
      // Predicated region
      $region9: #{tpu_custom_call.1} parent=5 // pred_check
        _
      $region10: #{tpu_custom_call.1} parent=5 // pred_check_branch
        %164 = sbr.rel (%p161) target = $region12
      $region11: #{tpu_custom_call.1} parent=5 // pred_region
        %s165 = ssub.s32 %s13, 1
        // Predicated region
        $region13: #{tpu_custom_call.1} parent=11 // pred_check
          %p166 = pneg %p102
        $region14: #{tpu_custom_call.1} parent=11 // pred_check_branch
          %168 = sbr.rel (%p166) target = $region16
        $region15: #{tpu_custom_call.1} parent=11 // pred_region
          _
        $region16: #{tpu_custom_call.1} parent=11 // pred_fallthru
          _
        // Predicated region
        $region17: #{tpu_custom_call.1} parent=11 // pred_check
          %p169 = pneg %p123
        $region18: #{tpu_custom_call.1} parent=11 // pred_check_branch
          %171 = sbr.rel (%p169) target = $region20
        $region19: #{tpu_custom_call.1} parent=11 // pred_region
          _
        $region20: #{tpu_custom_call.1} parent=11 // pred_fallthru
          _
      $region12: #{tpu_custom_call.1} parent=5 // pred_fallthru
        _
      %p172 = scmp.lt.s32.totalorder %s13, 2
      // Predicated region
      $region21: #{tpu_custom_call.1} parent=5 // pred_check
        %p173 = pneg %p172
      $region22: #{tpu_custom_call.1} parent=5 // pred_check_branch
        %175 = sbr.rel (%p173) target = $region24
      $region23: #{tpu_custom_call.1} parent=5 // pred_region
        // Predicated region
        $region25: #{tpu_custom_call.1} parent=23 // pred_check
          %p176 = pneg %p47
        $region26: #{tpu_custom_call.1} parent=23 // pred_check_branch
          %178 = sbr.rel (%p176) target = $region28
        $region27: #{tpu_custom_call.1} parent=23 // pred_region
          %p179 = scmp.lt.s32.totalorder %s20, 1
          %s180 = scalar_select %p179, %s20, 1
          %p181 = scmp.lt.s32.totalorder %s21, 0
          %s182 = scalar_select %p181, %s21, 0
          %s183 = sadd.s32 %s182, %s180
          %s184 = smul.addr %s183, 4
          %s185 = scalar_lea.vmem %s0, %s184
        $region28: #{tpu_custom_call.1} parent=23 // pred_fallthru
          _
        // Predicated region
        $region29: #{tpu_custom_call.1} parent=23 // pred_check
          %p186 = pneg %p75
        $region30: #{tpu_custom_call.1} parent=23 // pred_check_branch
          %188 = sbr.rel (%p186) target = $region32
        $region31: #{tpu_custom_call.1} parent=23 // pred_region
          %p189 = scmp.lt.s32.totalorder %s20, 1
          %s190 = scalar_select %p189, %s20, 1
          %p191 = scmp.lt.s32.totalorder %s21, 0
          %s192 = scalar_select %p191, %s21, 0
          %s193 = sadd.s32 %s192, %s190
          %s194 = smul.addr %s193, 4
          %s195 = scalar_lea.vmem %s1, %s194
        $region32: #{tpu_custom_call.1} parent=23 // pred_fallthru
          _
      $region24: #{tpu_custom_call.1} parent=5 // pred_fallthru
        _
      %p196 = scmp.le.s32.totalorder 1, %s13
      %p197 = scmp.lt.s32.totalorder %s13, 3
      %p198 = pnand %p196, %p197
      %p199 = pneg %p198
      // Predicated region
      $region33: #{tpu_custom_call.1} parent=5 // pred_check
        _
      $region34: #{tpu_custom_call.1} parent=5 // pred_check_branch
        %201 = sbr.rel (%p198) target = $region36
      $region35: #{tpu_custom_call.1} parent=5 // pred_region
        %s202 = ssub.s32 %s13, 1
        %p203 = scmp.lt.s32.totalorder %s22, 1
        %s204 = scalar_select %p203, %s22, 1
        %p205 = scmp.lt.s32.totalorder %s23, 0
        %s206 = scalar_select %p205, %s23, 0
        %s207 = sadd.s32 %s206, %s204
        %s208 = smul.addr %s207, 4
        %s209 = scalar_lea.vmem %s0, %s208
        %p210 = pneg %p53
        %p211 = pneg %p50
        %p212 = scmp.lt.s32.totalorder %s22, 1
        %s213 = scalar_select %p212, %s22, 1
        %p214 = scmp.lt.s32.totalorder %s23, 0
        %s215 = scalar_select %p214, %s23, 0
        %s216 = sadd.s32 %s215, %s213
        %s217 = smul.addr %s216, 4
        %s218 = scalar_lea.vmem %s1, %s217
        %p219 = pneg %p81
        %p220 = pneg %p78
        %p221 = pneg %p102
        %p222 = pneg %p99
        %p223 = pneg %p123
        %p224 = pneg %p120
        %p225 = pneg %p151
        %p226 = pneg %p148
        %s227 = sand.u32 %s138, 1
        %s228 = scalar_lea.sflag [#allocation3], %s227
        %s229 = sand.u32 %s138, 1
        %s230 = smul.addr %s229, 8
        %s231 = scalar_lea.vmem [#allocation2], %s230
        %p232 = scmp.lt.s32.totalorder %s22, 1
        %s233 = scalar_select %p232, %s22, 1
        %p234 = scmp.lt.s32.totalorder %s23, 0
        %s235 = scalar_select %p234, %s23, 0
        %s236 = sadd.s32 %s235, %s233
        %s237 = smul.addr %s236, 4
        %s238 = scalar_lea.vmem %s0, %s237
        %p239 = scmp.lt.s32.totalorder %s22, 1
        %s240 = scalar_select %p239, %s22, 1
        %p241 = scmp.lt.s32.totalorder %s23, 0
        %s242 = scalar_select %p241, %s23, 0
        %s243 = sadd.s32 %s242, %s240
        %s244 = smul.addr %s243, 4
        %s245 = scalar_lea.vmem %s1, %s244
        %v246 = vld [vmem:[%s2] sm:$0xff]
        %v247 = vld [vmem:[%s3] sm:$0xff]
        %v248 = vld [vmem:[%s238] sm:$0xf]
        %250 = vset.pattern.permute.xlu0 0
        %251 = vperm.xlu0 %250, %v247
        %v252 = vpop.permute.xlu0 %251
        %vm254 = vcmask 31744
        %v256 = vsel %vm254, %v246, 0
        %vm258 = vcmask 1043456
        %v260 = vsel %vm258, %v248, 0
        %262 = vmatpush.msra.mxu0 0.0
        %263 = vmatpush.msra.mxu0 0.0
        %264 = vmatpush.msra.mxu0 0.0
        %265 = vmatpush.msra.mxu0 0.0
        %266 = vmatpush.msra.mxu0 0.0
        %267 = vmatpush.msra.mxu0 0.0
        %268 = vmatpush.msra.mxu0 0.0
        %269 = vmatpush.msra.mxu0 0.0
        %270 = vmatpush.msra.mxu0 0.0
        %271 = vmatpush.msra.mxu0 0.0
        %272 = vmatpush.msra.mxu0 0.0
        %273 = vmatpush.msra.mxu0 0.0
        %274 = vmatpush.msra.mxu0 0.0
        %275 = vmatpush.msra.mxu0 0.0
        %276 = vmatpush.msra.mxu0 0.0
        %277 = vmatpush.msra.mxu0 %v260
        %278 = vmatmul.f32.gmra.mxu0 %v256
        %v279 = vpop.f32.mrf.mxu0
        %v280 = vadd.f32 %v252, %v279
        %281 = vdwg.mxu0
        %v282 = vld [vmem:[%s245] sm:$0xf]
        %v284 = vsel %vm258, %v282, 0
        %286 = vmatpush.msra.mxu0 0.0
        %287 = vmatpush.msra.mxu0 0.0
        %288 = vmatpush.msra.mxu0 0.0
        %289 = vmatpush.msra.mxu0 0.0
        %290 = vmatpush.msra.mxu0 0.0
        %291 = vmatpush.msra.mxu0 0.0
        %292 = vmatpush.msra.mxu0 0.0
        %293 = vmatpush.msra.mxu0 0.0
        %294 = vmatpush.msra.mxu0 0.0
        %295 = vmatpush.msra.mxu0 0.0
        %296 = vmatpush.msra.mxu0 0.0
        %297 = vmatpush.msra.mxu0 0.0
        %298 = vmatpush.msra.mxu0 0.0
        %299 = vmatpush.msra.mxu0 0.0
        %300 = vmatpush.msra.mxu0 0.0
        %301 = vmatpush.msra.mxu0 %v284
        %302 = vmatmul.f32.gmra.mxu0 %v256
        %v303 = vpop.f32.mrf.mxu0
        %v304 = vadd.f32 %v252, %v303
        %305 = vdwg.mxu0
        %v306 = vmax.f32 %v280, 0.0
        %v307 = vpack.c.bf16 %v306, %v306
        %vm308 = vcmask 519168
        %309 = vst.msk [vmem:[%s231] sm:$0xf] %vm308, %v307
        %v310 = vmax.f32 %v304, 0.0
        %v311 = vpack.c.bf16 %v310, %v310
        %s312 = scalar_lea.vmem %s231, 4 [#allocation2]
        %313 = vst.msk [vmem:[%s312] sm:$0xf] %vm308, %v311
        %s314 = sand.u32 %s138, 1
        %s315 = scalar_lea.sflag [#allocation3], %s314
        %s316 = sand.u32 %s138, 1
        %s317 = smul.addr %s316, 8
        %s318 = scalar_lea.vmem [#allocation2], %s317
        // Predicated region
        $region37: #{tpu_custom_call.1} parent=35 // pred_check
          %p319 = pneg %p148
        $region38: #{tpu_custom_call.1} parent=35 // pred_check_branch
          %321 = sbr.rel (%p319) target = $region40
        $region39: #{tpu_custom_call.1} parent=35 // pred_region
          %323 = vsyncadd %s315, 0
          %s324 = smul.addr %s22, 2
          %s325 = sadd.s32 %s23, %s324
          %s326 = smul.addr %s325, 4
          %s327 = scalar_lea.hbm %s4, %s326
          %s328 = sshll.u32 %s318, 4
          %s329 = int_to_ptr.vmem [resolvable:$true] %s328
          %s330 = sshll.u32 %s327, 4
          %s331 = int_to_ptr.hbm [resolvable:$true] %s330
          %336 = dma.vmem_to_hbm [thread:$0]  %s329, 128, %s331, %s315, 64, 64, 4
        $region40: #{tpu_custom_call.1} parent=35 // pred_fallthru
          _
      $region36: #{tpu_custom_call.1} parent=5 // pred_fallthru
        _
      %p337 = scmp.le.s32.totalorder 2, %s13
      // Predicated region
      $region41: #{tpu_custom_call.1} parent=5 // pred_check
        %p338 = pneg %p337
      $region42: #{tpu_custom_call.1} parent=5 // pred_check_branch
        %340 = sbr.rel (%p338) target = $region44
      $region43: #{tpu_custom_call.1} parent=5 // pred_region
        %s341 = ssub.s32 %s13, 2
        // Predicated region
        $region45: #{tpu_custom_call.1} parent=43 // pred_check
          %p342 = pneg %p154
        $region46: #{tpu_custom_call.1} parent=43 // pred_check_branch
          %344 = sbr.rel (%p342) target = $region48
        $region47: #{tpu_custom_call.1} parent=43 // pred_region
          %s345 = sand.u32 %s139, 1
          %s346 = scalar_lea.sflag [#allocation3], %s345
          %s347 = sand.u32 %s139, 1
          %s348 = smul.addr %s347, 8
          %s349 = scalar_lea.vmem [#allocation2], %s348
          %351 = dma.done %s346, 128
        $region48: #{tpu_custom_call.1} parent=43 // pred_fallthru
          _
      $region44: #{tpu_custom_call.1} parent=5 // pred_fallthru
        _
    $region6: #{tpu_custom_call.1} parent=1 // loop_footer
      %s17 = sadd.s32 1, %s13
    $region7: #{tpu_custom_call.1} parent=1 // loop_footer_branch
      %12 = sbr.rel target = $region3
    $region8: #{tpu_custom_call.1} parent=1 // loop_exit
      _
    %352 = vsyncpa [#allocation3], 1
    %s353 = scalar_lea.sflag [#allocation3], 1
    %354 = vsyncpa %s353, 1

</llo_original>
